<compile_context>
chip_gen: v7x
topology: tpu7x:2x2x1
jax: 0.10.0
libtpu: 0.0.40
codegen_flags: <defaults>
</compile_context>

<pallas_src>
import functools

import jax
import jax.numpy as jnp
import numpy as np
from jax import lax
from jax.experimental import pallas as pl
from jax.experimental.pallas import tpu as pltpu

LANE = 128
_VMEM_LIMIT = 32 * 1024 * 1024  # explicit budget; safe headroom on v5e/v6e/v7x


def _round_up(x, m):
    return (x + m - 1) // m * m


def _pick_row_tile(rows):
    for cand in (512, 256, 128, 64, 32, 16, 8):
        if rows % cand == 0:
            return cand
    return rows


# ----------------------------------------------------------------------------
# Kernels
# ----------------------------------------------------------------------------
def _matmul_bias_kernel(x_ref, w_ref, b_ref, o_ref):
    """o = x @ w + b  (x cast to the weight dtype, f32 accumulation)."""
    x = x_ref[...].astype(w_ref.dtype)
    o_ref[...] = jnp.dot(x, w_ref[...],
                         preferred_element_type=jnp.float32) + b_ref[...]


def _gru_recurrence_kernel(gi0_ref, h0_ref, whh0_ref, bhn0_ref,
                           wih1_ref, b1_ref, whh1_ref, bhn1_ref,
                           h1_ref, h_scr, *, tt, hp):
    """Processes `tt` timesteps per grid step. Hidden state lives in h_scr."""
    c = pl.program_id(0)

    @pl.when(c == 0)
    def _():
        h_scr[...] = h0_ref[...]

    B = h_scr.shape[1]

    # Hoist weight loads and bias broadcasts out of the unrolled time loop.
    whh0 = whh0_ref[...]                                    # (Hp, 3Hp) bf16
    wih1 = wih1_ref[...]                                    # (Hp, 3Hp) bf16
    whh1 = whh1_ref[...]                                    # (Hp, 3Hp) bf16
    b1 = jnp.broadcast_to(b1_ref[...], (B, 3 * hp))         # r/z biases pre-summed
    bhn0 = jnp.broadcast_to(bhn0_ref[...], (B, hp))         # n-gate hidden bias
    bhn1 = jnp.broadcast_to(bhn1_ref[...], (B, hp))

    def cell(gi, gh, bhn, h_prev):
        # gi already contains (b_i + b_h) for the r/z gates and b_in for n.
        r = jax.nn.sigmoid(gi[:, :hp] + gh[:, :hp])
        z = jax.nn.sigmoid(gi[:, hp:2 * hp] + gh[:, hp:2 * hp])
        n = jnp.tanh(gi[:, 2 * hp:] + r * (gh[:, 2 * hp:] + bhn))
        return (1.0 - z) * n + z * h_prev

    def step(t, carry):
        h0p, h1p = carry
        gi0 = gi0_ref[t]                                    # (B, 3Hp) f32 (precomputed)
        gh0 = jnp.dot(h0p.astype(jnp.bfloat16), whh0,
                      preferred_element_type=jnp.float32)
        h0n = cell(gi0, gh0, bhn0, h0p)

        # TODO(synk): nn.GRU inter-layer dropout (p=0.5) only applies in train
        # mode; this kernel implements the deterministic eval-mode forward.
        h0n_b = h0n.astype(jnp.bfloat16)
        gi1 = jnp.dot(h0n_b, wih1, preferred_element_type=jnp.float32) + b1
        gh1 = jnp.dot(h1p.astype(jnp.bfloat16), whh1,
                      preferred_element_type=jnp.float32)
        h1n = cell(gi1, gh1, bhn1, h1p)

        h1_ref[t] = h1n                                     # streamed per-step output
        return (h0n, h1n)

    h0f, h1f = lax.fori_loop(0, tt, step, (h_scr[0], h_scr[1]), unroll=True)
    h_scr[0] = h0f
    h_scr[1] = h1f


def _softmax_time_kernel(x_ref, o_ref):
    """Softmax over axis 0 (time) — independent per (batch, vocab) column."""
    x = x_ref[...]                                          # (T, B, tV) f32
    m = jnp.max(x, axis=0, keepdims=True)
    e = jnp.exp(x - m)
    s = jnp.sum(e, axis=0, keepdims=True)
    o_ref[...] = e * pl.reciprocal(s, approx=True)


# ----------------------------------------------------------------------------
# Parameter construction / preparation
# ----------------------------------------------------------------------------
def make_params(key, vocab_size, emb_dim, hidden_size):
    ks = jax.random.split(key, 12)
    k = 1.0 / np.sqrt(hidden_size)
    u = lambda kk, shp: jax.random.uniform(kk, shp, jnp.float32, -k, k)
    return {
        "embedding": jax.random.normal(ks[0], (vocab_size, emb_dim), jnp.float32),
        # GRU weights stored pre-transposed: (in_features, 3*H), gate order r,z,n
        "w_ih0_t": u(ks[1], (emb_dim, 3 * hidden_size)),
        "w_hh0_t": u(ks[2], (hidden_size, 3 * hidden_size)),
        "b_ih0":   u(ks[3], (1, 3 * hidden_size)),
        "b_hh0":   u(ks[4], (1, 3 * hidden_size)),
        "w_ih1_t": u(ks[5], (hidden_size, 3 * hidden_size)),
        "w_hh1_t": u(ks[6], (hidden_size, 3 * hidden_size)),
        "b_ih1":   u(ks[7], (1, 3 * hidden_size)),
        "b_hh1":   u(ks[8], (1, 3 * hidden_size)),
        # Linear stored pre-transposed: (H, V)
        "w_lin_t": u(ks[9], (hidden_size, vocab_size)),
        "b_lin":   u(ks[10], (1, vocab_size)),
    }


def prepare_kernel_params(p, emb_dim, hidden, vocab):
    """Zero-pad H/V to lane multiples, pre-sum r/z biases, cast weights to bf16.

    Zero padding is exact: padded hidden units start at 0 and stay at 0
    (r=z=0.5, n=0 => h_new = 0.5*h_prev = 0), and padded Linear rows/cols
    contribute nothing.
    """
    H, V, E = hidden, vocab, emb_dim
    Hp = _round_up(H, LANE)
    Vp = _round_up(V, LANE)

    def pad_gate_w(w, rows_pad):                 # (rows, 3H) -> (rows_pad, 3Hp) bf16
        rows = w.shape[0]
        w3 = w.reshape(rows, 3, H)
        out = jnp.zeros((rows_pad, 3, Hp), jnp.float32).at[:rows, :, :H].set(w3)
        return out.reshape(rows_pad, 3 * Hp).astype(jnp.bfloat16)

    def pad_gate_b(b):                           # (1, 3H) -> (1, 3Hp) f32
        b3 = b.reshape(1, 3, H)
        out = jnp.zeros((1, 3, Hp), jnp.float32).at[:, :, :H].set(b3)
        return out.reshape(1, 3 * Hp)

    def pad_vec(b):                              # (1, H) -> (1, Hp) f32
        return jnp.zeros((1, Hp), jnp.float32).at[:, :H].set(b)

    def rz_only(b):                              # zero out the n-gate third
        return jnp.concatenate([b[:, :2 * H], jnp.zeros((1, H), b.dtype)], axis=1)

    return {
        "H": H, "V": V, "Hp": Hp, "Vp": Vp,
        "w_ih0": pad_gate_w(p["w_ih0_t"], E),
        "w_hh0": pad_gate_w(p["w_hh0_t"], Hp),
        "w_ih1": pad_gate_w(p["w_ih1_t"], Hp),
        "w_hh1": pad_gate_w(p["w_hh1_t"], Hp),
        # r/z biases pre-summed (b_ih + b_hh); n-gate keeps b_in here, b_hn apart.
        "b0_comb": pad_gate_b(p["b_ih0"] + rz_only(p["b_hh0"])),
        "b1_comb": pad_gate_b(p["b_ih1"] + rz_only(p["b_hh1"])),
        "bhn0": pad_vec(p["b_hh0"][:, 2 * H:]),
        "bhn1": pad_vec(p["b_hh1"][:, 2 * H:]),
        "w_lin": jnp.zeros((Hp, Vp), jnp.float32)
                    .at[:H, :V].set(p["w_lin_t"]).astype(jnp.bfloat16),
        "b_lin": jnp.zeros((1, Vp), jnp.float32).at[:, :V].set(p["b_lin"]),
    }


# ----------------------------------------------------------------------------
# Forward pass
# ----------------------------------------------------------------------------
def decoder_forward(x_emb, h0, kp, *, time_tile=8):
    """x_emb: (T, B, E) f32, h0: (2, B, H) f32 -> (T, B, V) f32 probabilities."""
    T, B, E = x_emb.shape
    H, V, Hp, Vp = kp["H"], kp["V"], kp["Hp"], kp["Vp"]

    tt = min(time_tile, T)
    while T % tt:
        tt -= 1
    rows = T * B
    rt = _pick_row_tile(rows)
    tv = LANE

    def cparams(sem):
        return pltpu.CompilerParams(dimension_semantics=sem,
                                    vmem_limit_bytes=_VMEM_LIMIT)

    # ---- Phase 1: batched layer-0 input projection (hoisted out of the loop).
    x2 = x_emb.reshape(rows, E)
    gi0_2 = pl.pallas_call(
        _matmul_bias_kernel,
        out_shape=jax.ShapeDtypeStruct((rows, 3 * Hp), jnp.float32),
        grid=(rows // rt,),
        in_specs=[pl.BlockSpec((rt, E), lambda i: (i, 0)),
                  pl.BlockSpec((E, 3 * Hp), lambda i: (0, 0)),
                  pl.BlockSpec((1, 3 * Hp), lambda i: (0, 0))],
        out_specs=pl.BlockSpec((rt, 3 * Hp), lambda i: (i, 0)),
        compiler_params=cparams(("parallel",)),
    )(x2, kp["w_ih0"], kp["b0_comb"])
    gi0 = gi0_2.reshape(T, B, 3 * Hp)

    # ---- Phase 2: sequential GRU recurrence, `tt` timesteps per grid step.
    h0p = jnp.zeros((2, B, Hp), jnp.float32).at[:, :, :H].set(h0)
    rec_kernel = functools.partial(_gru_recurrence_kernel, tt=tt, hp=Hp)
    h1_all = pl.pallas_call(
        rec_kernel,
        out_shape=jax.ShapeDtypeStruct((T, B, Hp), jnp.float32),
        grid=(T // tt,),
        in_specs=[
            pl.BlockSpec((tt, B, 3 * Hp), lambda c: (c, 0, 0)),   # gi0 chunk
            pl.BlockSpec((2, B, Hp), lambda c: (0, 0, 0)),        # h0
            pl.BlockSpec((Hp, 3 * Hp), lambda c: (0, 0)),         # w_hh_l0
            pl.BlockSpec((1, Hp), lambda c: (0, 0)),              # b_hn_l0
            pl.BlockSpec((Hp, 3 * Hp), lambda c: (0, 0)),         # w_ih_l1
            pl.BlockSpec((1, 3 * Hp), lambda c: (0, 0)),          # combined b_l1
            pl.BlockSpec((Hp, 3 * Hp), lambda c: (0, 0)),         # w_hh_l1
            pl.BlockSpec((1, Hp), lambda c: (0, 0)),              # b_hn_l1
        ],
        out_specs=pl.BlockSpec((tt, B, Hp), lambda c: (c, 0, 0)), # streamed h1
        scratch_shapes=[pltpu.VMEM((2, B, Hp), jnp.float32)],     # hidden state
        compiler_params=cparams(("arbitrary",)),                  # sequential
    )(gi0, h0p, kp["w_hh0"], kp["bhn0"], kp["w_ih1"], kp["b1_comb"],
      kp["w_hh1"], kp["bhn1"])

    # ---- Phase 3: batched output Linear, tiled over the vocab axis.
    h1_2 = h1_all.reshape(rows, Hp)
    logits2 = pl.pallas_call(
        _matmul_bias_kernel,
        out_shape=jax.ShapeDtypeStruct((rows, Vp), jnp.float32),
        grid=(rows // rt, Vp // tv),
        in_specs=[pl.BlockSpec((rt, Hp), lambda i, j: (i, 0)),
                  pl.BlockSpec((Hp, tv), lambda i, j: (0, j)),
                  pl.BlockSpec((1, tv), lambda i, j: (0, j))],
        out_specs=pl.BlockSpec((rt, tv), lambda i, j: (i, j)),
        compiler_params=cparams(("parallel", "parallel")),
    )(h1_2, kp["w_lin"], kp["b_lin"])

    # ---- Phase 4: softmax over the time axis (dim 0), tiled over vocab.
    logits3 = logits2.reshape(T, B, Vp)
    probs_p = pl.pallas_call(
        _softmax_time_kernel,
        out_shape=jax.ShapeDtypeStruct((T, B, Vp), jnp.float32),
        grid=(Vp // tv,),
        in_specs=[pl.BlockSpec((T, B, tv), lambda j: (0, 0, j))],
        out_specs=pl.BlockSpec((T, B, tv), lambda j: (0, 0, j)),
        compiler_params=cparams(("parallel",)),
    )(logits3)

    return probs_p[:, :, :V]


# ----------------------------------------------------------------------------
# Pure-JAX reference (f32) for a sanity check
# ----------------------------------------------------------------------------
def reference_forward(x_emb, h0, p):
    H = h0.shape[-1]

    def cell(x, h, wih, whh, bih, bhh):
        gi = x @ wih + bih
        gh = h @ whh + bhh
        r = jax.nn.sigmoid(gi[:, :H] + gh[:, :H])
        z = jax.nn.sigmoid(gi[:, H:2 * H] + gh[:, H:2 * H])
        n = jnp.tanh(gi[:, 2 * H:] + r * gh[:, 2 * H:])
        return (1.0 - z) * n + z * h

    def step(carry, x_t):
        h0_, h1_ = carry
        h0n = cell(x_t, h0_, p["w_ih0_t"], p["w_hh0_t"], p["b_ih0"], p["b_hh0"])
        h1n = cell(h0n, h1_, p["w_ih1_t"], p["w_hh1_t"], p["b_ih1"], p["b_hh1"])
        return (h0n, h1n), h1n

    _, outs = jax.lax.scan(step, (h0[0], h0[1]), x_emb)
    logits = outs @ p["w_lin_t"] + p["b_lin"]
    return jax.nn.softmax(logits, axis=0)   # dim=0: PyTorch legacy default on 3-D


if __name__ == "__main__":
    VOCAB, EMB, HIDDEN = 32, 16, 32
    T, B = 8, 2

    key = jax.random.PRNGKey(0)
    k_param, k_tok, k_h = jax.random.split(key, 3)

    params = make_params(k_param, VOCAB, EMB, HIDDEN)
    kparams = prepare_kernel_params(params, EMB, HIDDEN, VOCAB)

    tokens = jax.random.randint(k_tok, (T, B), 0, VOCAB, dtype=jnp.int32)
    h0 = jax.random.normal(k_h, (2, B, HIDDEN), jnp.float32)

    # Embedding gather done in plain JAX glue (data-dependent gather).
    x_emb = params["embedding"][tokens]                         # (T, B, E)

    probs = decoder_forward(x_emb, h0, kparams, time_tile=4)    # grid of 2 chunks
    probs = jax.block_until_ready(probs)

    ref = reference_forward(x_emb, h0, params)
    assert probs.shape == (T, B, VOCAB)
    # Tolerance loosened for bf16 MXU operands (f32 accumulation kept).
    np.testing.assert_allclose(np.asarray(probs), np.asarray(ref),
                               rtol=2e-2, atol=2e-2)

    print("KERNEL_OK")
</pallas_src>

<mosaic_0001>
module attributes {stable_mosaic.version = 11 : i64} {
  func.func @_matmul_bias_kernel(%arg0: i32, %arg1: memref<16x16xf32, #tpu.memory_space<vmem>>, %arg2: memref<16x384xbf16, #tpu.memory_space<vmem>>, %arg3: memref<1x384xf32, #tpu.memory_space<vmem>>, %arg4: memref<16x384xf32, #tpu.memory_space<vmem>>) attributes {dimension_semantics = [#tpu.dimension_semantics<parallel>], iteration_bounds = array<i64: 1>, scalar_prefetch = 0 : i64, scratch_operands = 0 : i64, tpu.core_type = #tpu.core_type<tc>, window_params = [{transform_indices = @transform_0, window_bounds = array<i64: 16, 16>}, {pipeline_mode = #tpu.pipeline_mode<synchronous>, transform_indices = @transform_1, window_bounds = array<i64: 16, 384>}, {pipeline_mode = #tpu.pipeline_mode<synchronous>, transform_indices = @transform_2, window_bounds = array<i64: 1, 384>}, {transform_indices = @transform_3, window_bounds = array<i64: 16, 384>}]} {
    %c0 = arith.constant 0 : index
    %c0_0 = arith.constant 0 : index
    %0 = vector.load %arg1[%c0, %c0_0] : memref<16x16xf32, #tpu.memory_space<vmem>>, vector<16x16xf32>
    %1 = arith.truncf %0 : vector<16x16xf32> to vector<16x16xbf16>
    %c0_1 = arith.constant 0 : index
    %c0_2 = arith.constant 0 : index
    %2 = vector.load %arg2[%c0_1, %c0_2] : memref<16x384xbf16, #tpu.memory_space<vmem>>, vector<16x384xbf16>
    %cst = arith.constant dense<0.000000e+00> : vector<16x384xf32>
    %3 = tpu.matmul %1, %2, %cst {dimension_numbers = #tpu.dot_dimension_numbers<[1], [0], [0], [1], [0, 0, 1, 1], [], []>} : vector<16x16xbf16>, vector<16x384xbf16>, vector<16x384xf32> -> vector<16x384xf32>
    %c0_3 = arith.constant 0 : index
    %c0_4 = arith.constant 0 : index
    %4 = vector.load %arg3[%c0_3, %c0_4] : memref<1x384xf32, #tpu.memory_space<vmem>>, vector<1x384xf32>
    %5 = vector.broadcast %4 : vector<1x384xf32> to vector<16x384xf32>
    %6 = arith.addf %3, %5 : vector<16x384xf32>
    %c0_5 = arith.constant 0 : index
    %c0_6 = arith.constant 0 : index
    %7 = vector.load %arg4[%c0_5, %c0_6] : memref<16x384xf32, #tpu.memory_space<vmem>>, vector<16x384xf32>
    tpu.vector_store %arg4[%c0_5, %c0_6], %6 {strides = array<i32>} : memref<16x384xf32, #tpu.memory_space<vmem>>, vector<16x384xf32>,
    return
  }
  func.func @transform_0(%arg0: i32) -> (i32, i32) {
    %c0_i32 = arith.constant 0 : i32
    %c0_i32_0 = arith.constant 0 : i32
    return %arg0, %c0_i32 : i32, i32
  }
  func.func @transform_1(%arg0: i32) -> (i32, i32) {
    %c0_i32 = arith.constant 0 : i32
    %c0_i32_0 = arith.constant 0 : i32
    %c0_i32_1 = arith.constant 0 : i32
    return %c0_i32, %c0_i32_0 : i32, i32
  }
  func.func @transform_2(%arg0: i32) -> (i32, i32) {
    %c0_i32 = arith.constant 0 : i32
    %c0_i32_0 = arith.constant 0 : i32
    %c0_i32_1 = arith.constant 0 : i32
    return %c0_i32, %c0_i32_0 : i32, i32
  }
  func.func @transform_3(%arg0: i32) -> (i32, i32) {
    %c0_i32 = arith.constant 0 : i32
    %c0_i32_0 = arith.constant 0 : i32
    return %arg0, %c0_i32 : i32, i32
  }
}

</mosaic_0001>

<llo_original>
// kernel: tpu_custom_call.1
$region0: #{tpu_custom_call.1}
  #allocation0 [shape = 'u32[]', space=smem, size = 0x4, offset = 0x4, fixed_abs, tag = 'smem constant byte address 0x4 - core index']
  #allocation1 [shape = 'u32[144,128]{1,0:T(1,128)}', space=vmem, size = 0x12000, scoped, tag = 'internal scratch']
  %s0 = inlined_call_operand.hbm [shape: f32[16,16], index: 0, kind: input, shape index: {}]
  %s1 = inlined_call_operand.hbm [shape: bf16[16,384], index: 1, kind: input, shape index: {}]
  %s2 = inlined_call_operand.vmem [shape: f32[1,384], index: 2, kind: input, shape index: {}]
  %s3 = inlined_call_operand.hbm [shape: f32[16,384], index: 3, kind: output, shape index: {}]
  %s4 = sld [smem:[#allocation0]]
  $region30: #{tpu_custom_call.1} parent=0
    _
  %s6 = ssub.s32 1, %s4
  %s7 = scalar_select 0, %s6, %s4
  $region1: #{tpu_custom_call.1} parent=0
    #allocation2 [shape = 'u8[8192]{0}', space=vmem, size = 0x2000, scoped, tag = 'input window, operand 0, single buffered']
    #allocation3 [shape = 's32[1]{0}', space=sflag, size = 0x4, scoped, tag = 'scoped memory for tpu_custom_call.1']
    #allocation4 [shape = 's32[1]{0}', space=sflag, size = 0x4, scoped, tag = 'scoped memory for tpu_custom_call.1']
    #allocation5 [shape = 'u8[12288]{0}', space=vmem, size = 0x3000, scoped, tag = 'input window, operand 1, single buffered']
    #allocation6 [shape = 's32[1]{0}', space=sflag, size = 0x4, scoped, tag = 'scoped memory for tpu_custom_call.1']
    #allocation7 [shape = 'u8[24576]{0}', space=vmem, size = 0x6000, scoped, tag = 'output window, operand 0, single buffered']
    %8 = vsyncpa [#allocation3], 0
    %9 = vsyncpa [#allocation6], 0
    %10 = vsyncpa [#allocation4], 0
    // Predicated region
    $region2: #{tpu_custom_call.1} parent=1 // pred_check
      _
    $region3: #{tpu_custom_call.1} parent=1 // pred_check_branch
      %12 = sbr.rel (0) target = $region5
    $region4: #{tpu_custom_call.1} parent=1 // pred_region
      %s14 = ssub.s32 256, 256
      %15 = vsyncadd [#allocation3], %s14
      %s16 = sshll.u32 [#allocation2], 4
      %s17 = int_to_ptr.vmem [resolvable:$true] %s16
      %22 = dma.hbm_to_vmem [thread:$0]  %s0, 256, %s17, [#allocation3], 128, 128, 8
    $region5: #{tpu_custom_call.1} parent=1 // pred_fallthru
      _
    // Predicated region
    $region6: #{tpu_custom_call.1} parent=1 // pred_check
      _
    $region7: #{tpu_custom_call.1} parent=1 // pred_check_branch
      %24 = sbr.rel (0) target = $region9
    $region8: #{tpu_custom_call.1} parent=1 // pred_region
      %s26 = ssub.s32 384, 384
      %27 = vsyncadd [#allocation6], %s26
      %s28 = sshll.u32 [#allocation5], 4
      %s29 = int_to_ptr.vmem [resolvable:$true] %s28
      %34 = dma.hbm_to_vmem [thread:$0]  %s1, 384, %s29, [#allocation6], 192, 192, 12
    $region9: #{tpu_custom_call.1} parent=1 // pred_fallthru
      _
    // Predicated region
    $region10: #{tpu_custom_call.1} parent=1 // pred_check
      _
    $region11: #{tpu_custom_call.1} parent=1 // pred_check_branch
      %36 = sbr.rel (0) target = $region13
    $region12: #{tpu_custom_call.1} parent=1 // pred_region
      _
    $region13: #{tpu_custom_call.1} parent=1 // pred_fallthru
      _
    // Predicated region
    $region14: #{tpu_custom_call.1} parent=1 // pred_check
      _
    $region15: #{tpu_custom_call.1} parent=1 // pred_check_branch
      %38 = sbr.rel (0) target = $region17
    $region16: #{tpu_custom_call.1} parent=1 // pred_region
      %39 = dma.done [#allocation3], 256
    $region17: #{tpu_custom_call.1} parent=1 // pred_fallthru
      _
    // Predicated region
    $region18: #{tpu_custom_call.1} parent=1 // pred_check
      _
    $region19: #{tpu_custom_call.1} parent=1 // pred_check_branch
      %41 = sbr.rel (0) target = $region21
    $region20: #{tpu_custom_call.1} parent=1 // pred_region
      %42 = dma.done [#allocation6], 384
    $region21: #{tpu_custom_call.1} parent=1 // pred_fallthru
      _
    %v44 = vld [vmem:[#allocation2] sm:$0xff]
    %v45 = vld [vmem:[#allocation2 + $0x8] sm:$0xff]
    %v46 = vpack.c.bf16 %v45, %v44
    %v47 = vld [vmem:[#allocation5] sm:$0xff]
    %v48 = vld [vmem:[#allocation5 + $0x8] sm:$0xf]
    %v49 = vld [vmem:[#allocation5 + $0xc] sm:$0xff]
    %v50 = vld [vmem:[#allocation5 + $0x14] sm:$0xf]
    %v51 = vld [vmem:[%s2] sm:$0x7]
    %v53 = vlaneseq
    %v54 = vshrl.u32 %v53, 7
    %v55 = vsub.s32 0, %v54
    %v56 = vrot.slane %v51, %v55
    %v57 = vlaneseq
    %v58 = vshrl.u32 %v57, 7
    %v59 = vsub.s32 1, %v58
    %v60 = vrot.slane %v51, %v59
    %v61 = vlaneseq
    %v62 = vshrl.u32 %v61, 7
    %v63 = vsub.s32 2, %v62
    %v64 = vrot.slane %v51, %v63
    %v72 = vunpack.c.l.b16 %v47
    %v73 = vunpack.c.h.b16 %v47
    %v74 = vunpack.c.l.b16 %v48
    %v75 = vunpack.c.l.b16 %v49
    %v76 = vunpack.c.h.b16 %v49
    %v77 = vunpack.c.l.b16 %v50
    %v78 = vpack.c.b16 %v75, %v72
    %v79 = vpack.c.b16 %v76, %v73
    %v80 = vpack.c.b16 %v77, %v74
    %vm84 = vcmask 130048
    %v86 = vsel %vm84, %v46, 0
    %88 = vmatprep.subr.bf16.mxu0 %v79
    %89 = vmatpush1.bf16.msra.mxu0 %v78
    %90 = vmatprep.subr.bf16.mxu0 0
    %91 = vmatpush1.bf16.msra.mxu0 0
    %92 = vmatprep.subr.bf16.mxu0 0
    %93 = vmatpush1.bf16.msra.mxu0 0
    %94 = vmatprep.subr.bf16.mxu0 0
    %95 = vmatpush1.bf16.msra.mxu0 0
    %96 = vmatprep.subr.bf16.mxu0 0
    %97 = vmatpush1.bf16.msra.mxu0 0
    %98 = vmatprep.subr.bf16.mxu0 0
    %99 = vmatpush1.bf16.msra.mxu0 0
    %100 = vmatprep.subr.bf16.mxu0 0
    %101 = vmatpush1.bf16.msra.mxu0 0
    %102 = vmatprep.subr.bf16.mxu0 0
    %103 = vmatpush1.bf16.msra.mxu0 0
    %104 = vmatprep.subr.bf16.mxu0 0
    %105 = vmatpush1.bf16.msra.mxu0 0
    %106 = vmatprep.subr.bf16.mxu0 0
    %107 = vmatpush1.bf16.msra.mxu0 0
    %108 = vmatprep.subr.bf16.mxu0 0
    %109 = vmatpush1.bf16.msra.mxu0 0
    %110 = vmatprep.subr.bf16.mxu0 0
    %111 = vmatpush1.bf16.msra.mxu0 0
    %112 = vmatprep.subr.bf16.mxu0 0
    %113 = vmatpush1.bf16.msra.mxu0 0
    %114 = vmatprep.subr.bf16.mxu0 0
    %115 = vmatpush1.bf16.msra.mxu0 0
    %116 = vmatprep.subr.bf16.mxu0 0
    %117 = vmatpush1.bf16.msra.mxu0 0
    %118 = vmatprep.subr.bf16.mxu0 0
    %119 = vmatpush1.bf16.msra.mxu0 0
    %120 = vmatprep.mubr.bf16.mxu0 0
    %121 = vmatmul.mubr.bf16.gmra.mrb[0].mxu0 %v86
    %v122 = vpop.f32.mrb[0].mxu0
    %v123 = vadd.f32 %v56, %v122
    %v124 = vpop.f32.mrb[0].mxu0
    %v125 = vadd.f32 %v60, %v124
    %v126 = vpop.f32.mrb[0].mxu0
    %v127 = vadd.f32 %v56, %v126
    %v128 = vpop.f32.mrb[0].mxu0
    %v129 = vadd.f32 %v60, %v128
    %130 = vdwg.mxu0
    %131 = vmatprep.subr.bf16.mxu0 0
    %132 = vmatpush1.bf16.msra.mxu0 %v80
    %133 = vmatprep.subr.bf16.mxu0 0
    %134 = vmatpush1.bf16.msra.mxu0 0
    %135 = vmatprep.subr.bf16.mxu0 0
    %136 = vmatpush1.bf16.msra.mxu0 0
    %137 = vmatprep.subr.bf16.mxu0 0
    %138 = vmatpush1.bf16.msra.mxu0 0
    %139 = vmatprep.subr.bf16.mxu0 0
    %140 = vmatpush1.bf16.msra.mxu0 0
    %141 = vmatprep.subr.bf16.mxu0 0
    %142 = vmatpush1.bf16.msra.mxu0 0
    %143 = vmatprep.subr.bf16.mxu0 0
    %144 = vmatpush1.bf16.msra.mxu0 0
    %145 = vmatprep.subr.bf16.mxu0 0
    %146 = vmatpush1.bf16.msra.mxu0 0
    %147 = vmatprep.subr.bf16.mxu0 0
    %148 = vmatpush1.bf16.msra.mxu0 0
    %149 = vmatprep.subr.bf16.mxu0 0
    %150 = vmatpush1.bf16.msra.mxu0 0
    %151 = vmatprep.subr.bf16.mxu0 0
    %152 = vmatpush1.bf16.msra.mxu0 0
    %153 = vmatprep.subr.bf16.mxu0 0
    %154 = vmatpush1.bf16.msra.mxu0 0
    %155 = vmatprep.subr.bf16.mxu0 0
    %156 = vmatpush1.bf16.msra.mxu0 0
    %157 = vmatprep.subr.bf16.mxu0 0
    %158 = vmatpush1.bf16.msra.mxu0 0
    %159 = vmatprep.subr.bf16.mxu0 0
    %160 = vmatpush1.bf16.msra.mxu0 0
    %161 = vmatprep.subr.bf16.mxu0 0
    %162 = vmatpush1.bf16.msra.mxu0 0
    %163 = vmatprep.mubr.bf16.mxu0 0
    %164 = vmatmul.mubr.bf16.gmra.mrb[0].mxu0 %v86
    %v165 = vpop.f32.mrb[0].mxu0
    %v166 = vadd.f32 %v64, %v165
    %v167 = vpop.f32.mrb[0].mxu0
    %v168 = vpop.f32.mrb[0].mxu0
    %v169 = vadd.f32 %v64, %v168
    %v170 = vpop.f32.mrb[0].mxu0
    %171 = vdwg.mxu0
    %172 = vst [vmem:[#allocation7] sm:$0xff] %v123
    %173 = vst [vmem:[#allocation7 + $0x8] sm:$0xff] %v125
    %174 = vst [vmem:[#allocation7 + $0x10] sm:$0xff] %v166
    %175 = vst [vmem:[#allocation7 + $0x18] sm:$0xff] %v127
    %176 = vst [vmem:[#allocation7 + $0x20] sm:$0xff] %v129
    %177 = vst [vmem:[#allocation7 + $0x28] sm:$0xff] %v169
    // Predicated region
    $region22: #{tpu_custom_call.1} parent=1 // pred_check
      _
    $region23: #{tpu_custom_call.1} parent=1 // pred_check_branch
      %179 = sbr.rel (0) target = $region25
    $region24: #{tpu_custom_call.1} parent=1 // pred_region
      %s181 = ssub.s32 768, 768
      %182 = vsyncadd [#allocation4], %s181
      %s183 = sshll.u32 [#allocation7], 4
      %s184 = int_to_ptr.vmem [resolvable:$true] %s183
      %189 = dma.vmem_to_hbm [thread:$0]  %s184, 768, %s3, [#allocation4], 384, 384, 24
    $region25: #{tpu_custom_call.1} parent=1 // pred_fallthru
      _
    // Predicated region
    $region26: #{tpu_custom_call.1} parent=1 // pred_check
      _
    $region27: #{tpu_custom_call.1} parent=1 // pred_check_branch
      %191 = sbr.rel (0) target = $region29
    $region28: #{tpu_custom_call.1} parent=1 // pred_region
      %192 = dma.done [#allocation4], 768
    $region29: #{tpu_custom_call.1} parent=1 // pred_fallthru
      _
    %193 = vsyncpa [#allocation3], 1
    %194 = vsyncpa [#allocation6], 1
    %195 = vsyncpa [#allocation4], 1

</llo_original>
